<compile_context>
chip_gen: v6e
topology: v6e:2x2x1
jax: 0.10.0
libtpu: 0.0.40
codegen_flags: <defaults>
</compile_context>

<pallas_src>
import functools

import jax
import jax.numpy as jnp
from jax.experimental import pallas as pl
from jax.experimental.pallas import tpu as pltpu

_LANE = 128      # vreg lane width
_SUBLANE = 8     # f32 sublane count


def _round_up(v, m):
    return ((v + m - 1) // m) * m


def _trunknet_kernel(num_layers, *refs):
    """Fused MLP forward for one batch tile.

    refs layout: (x_ref, w0_ref, b0_ref, w1_ref, b1_ref, ..., out_ref)
    Layers 0 .. num_layers-2 are followed by ReLU; the last layer is linear.
    Weights are (fan_in, fan_out); biases are (1, fan_out). Weights/biases use
    a constant index_map so they stay resident in VMEM across grid steps.
    """
    x_ref = refs[0]
    out_ref = refs[-1]
    param_refs = refs[1:-1]

    h = x_ref[...]  # (TB, in_features), float32
    for layer in range(num_layers):
        w = param_refs[2 * layer][...]       # (fan_in, fan_out)
        b = param_refs[2 * layer + 1][...]   # (1, fan_out)
        h = jnp.dot(h, w, preferred_element_type=jnp.float32) + b
        if layer < num_layers - 1:
            h = jnp.maximum(h, 0.0)          # ReLU
    out_ref[...] = h.astype(out_ref.dtype)


def prepare_trunknet_params(params):
    """One-time conversion of PyTorch-layout params to kernel layout.

    Transposes each W from (out, in) to (in, out), reshapes biases to (1, out),
    and zero-pads the final layer's output dim to a lane multiple (>=128) so
    the kernel's stores are lane-dense. Do this ONCE, not per forward call.

    Returns: (prepped_params, output_size, padded_output_size)
    """
    num_layers = len(params)
    output_size = int(params[-1][0].shape[0])
    out_pad = max(_LANE, _round_up(output_size, _LANE))
    prepped = []
    for i, (w, b) in enumerate(params):
        wt = jnp.asarray(w, jnp.float32).T           # (in, out)
        br = jnp.asarray(b, jnp.float32)[None, :]    # (1, out)
        if i == num_layers - 1 and out_pad != output_size:
            wt = jnp.pad(wt, ((0, 0), (0, out_pad - output_size)))
            br = jnp.pad(br, ((0, 0), (0, out_pad - output_size)))
        prepped.append((wt, br))
    return prepped, output_size, out_pad


def _pick_batch_tile(batch, in_features, widths, out_pad, param_bytes,
                     max_tile):
    """Largest batch tile (multiple of 8) that fits a chip-safe VMEM budget."""
    budget = 20 << 20  # safe w.r.t. v7x 64 MiB physical and v5e/v6e defaults
    max_w = max(widths + (out_pad, in_features))
    # Per-row bytes: double-buffered x + out tiles plus activation headroom.
    row_bytes = 4 * (2 * in_features + 2 * out_pad + 2 * max_w)
    resident = 2 * param_bytes  # params are double-buffered by the pipeline
    tb = min(max_tile, _round_up(batch, _SUBLANE))
    while tb > _SUBLANE and tb * row_bytes + resident > budget:
        tb //= 2
    return max(_SUBLANE, (tb // _SUBLANE) * _SUBLANE)


def trunknet_forward(x, prepped_params, *, output_size, out_pad,
                     max_tile=1024):
    """Run TrunkNet forward with a single batch-tiled fused Pallas kernel.

    Args:
      x: (batch, input_size) float32.
      prepped_params: output of prepare_trunknet_params.
      output_size: true (unpadded) output width.
      out_pad: padded output width used by the kernel (lane multiple).
      max_tile: upper bound on the batch tile size.
    Returns:
      (batch, output_size) float32.
    """
    x = jnp.asarray(x, jnp.float32)
    batch, in_features = x.shape
    num_layers = len(prepped_params)

    param_bytes = sum(w.size * 4 + b.size * 4 for w, b in prepped_params)
    hidden_widths = tuple(int(w.shape[1]) for w, _ in prepped_params[:-1])
    tb = _pick_batch_tile(batch, in_features, hidden_widths, out_pad,
                          param_bytes, max_tile)

    padded_batch = _round_up(batch, tb)
    if padded_batch != batch:
        x = jnp.pad(x, ((0, padded_batch - batch), (0, 0)))
    grid = (pl.cdiv(padded_batch, tb),)

    # x / out: blocks march down the batch. Weights / biases: constant block
    # index -> DMA'd once, resident in VMEM across all grid steps.
    kernel_args = [x]
    in_specs = [pl.BlockSpec((tb, in_features), lambda i: (i, 0))]
    for w, b in prepped_params:
        kernel_args.append(w)
        kernel_args.append(b)
        in_specs.append(pl.BlockSpec(w.shape, lambda i: (0, 0)))
        in_specs.append(pl.BlockSpec(b.shape, lambda i: (0, 0)))
    out_specs = pl.BlockSpec((tb, out_pad), lambda i: (i, 0))

    # Explicit VMEM budget: double-buffered x/out tiles, double-buffered
    # resident params, plus activation headroom. Capped below v7x physical.
    max_w = max(hidden_widths + (out_pad, in_features))
    vmem_bytes = int(min(
        56 << 20,
        2 * (tb * in_features + tb * out_pad) * 4   # pipelined x / out tiles
        + 2 * param_bytes                           # resident weights/biases
        + 2 * tb * max_w * 4                        # live activations
        + (4 << 20),                                # slack
    ))

    kernel = functools.partial(_trunknet_kernel, num_layers)
    out = pl.pallas_call(
        kernel,
        out_shape=jax.ShapeDtypeStruct((padded_batch, out_pad), jnp.float32),
        grid=grid,
        in_specs=in_specs,
        out_specs=out_specs,
        compiler_params=pltpu.CompilerParams(
            dimension_semantics=("parallel",),   # megacore-shard batch on v7x
            vmem_limit_bytes=vmem_bytes,
        ),
    )(*kernel_args)
    return out[:batch, :output_size]


def init_trunknet_params(key, input_size, hidden_size, output_size,
                         num_hidden_layers):
    """Deterministic init mimicking PyTorch nn.Linear (U[-k, k], k=1/sqrt(fan_in))."""
    sizes = ([(input_size, hidden_size)]
             + [(hidden_size, hidden_size)] * (num_hidden_layers - 1)
             + [(hidden_size, output_size)])
    params = []
    for fan_in, fan_out in sizes:
        key, kw, kb = jax.random.split(key, 3)
        bound = 1.0 / jnp.sqrt(float(fan_in))
        w = jax.random.uniform(kw, (fan_out, fan_in), jnp.float32, -bound, bound)
        b = jax.random.uniform(kb, (fan_out,), jnp.float32, -bound, bound)
        params.append((w, b))
    return params


def trunknet_reference(x, params):
    """Plain-JAX reference of the same forward pass (for a sanity check)."""
    h = x
    for i, (w, b) in enumerate(params):
        h = h @ w.T + b
        if i < len(params) - 1:
            h = jnp.maximum(h, 0.0)
    return h


if __name__ == "__main__":
    # Small, deterministic example shapes. batch is NOT a multiple of the tile
    # and max_tile is shrunk so the run exercises grid>1, pipelining, batch
    # padding and the lane-padded output slice.
    batch = 40
    input_size = 8      # trunk inputs = query-point coordinates
    hidden_size = 32
    output_size = 16
    num_hidden_layers = 3

    key = jax.random.PRNGKey(0)
    key, kx = jax.random.split(key)
    x = jax.random.normal(kx, (batch, input_size), jnp.float32)

    params = init_trunknet_params(key, input_size, hidden_size, output_size,
                                  num_hidden_layers)
    prepped, out_size, out_pad = prepare_trunknet_params(params)

    fwd = jax.jit(functools.partial(trunknet_forward,
                                    output_size=out_size,
                                    out_pad=out_pad,
                                    max_tile=16))
    out = jax.block_until_ready(fwd(x, prepped))

    ref = trunknet_reference(x, params)
    assert out.shape == (batch, output_size)
    assert jnp.allclose(out, ref, atol=1e-5, rtol=1e-5), "mismatch vs reference"

    print("KERNEL_OK")
</pallas_src>

<mosaic_0001>
module attributes {stable_mosaic.version = 11 : i64} {
  func.func @_trunknet_kernel(%arg0: i32, %arg1: memref<16x8xf32, #tpu.memory_space<vmem>>, %arg2: memref<8x32xf32, #tpu.memory_space<vmem>>, %arg3: memref<1x32xf32, #tpu.memory_space<vmem>>, %arg4: memref<32x32xf32, #tpu.memory_space<vmem>>, %arg5: memref<1x32xf32, #tpu.memory_space<vmem>>, %arg6: memref<32x32xf32, #tpu.memory_space<vmem>>, %arg7: memref<1x32xf32, #tpu.memory_space<vmem>>, %arg8: memref<32x128xf32, #tpu.memory_space<vmem>>, %arg9: memref<1x128xf32, #tpu.memory_space<vmem>>, %arg10: memref<16x128xf32, #tpu.memory_space<vmem>>) attributes {dimension_semantics = [#tpu.dimension_semantics<parallel>], iteration_bounds = array<i64: 3>, scalar_prefetch = 0 : i64, scratch_operands = 0 : i64, tpu.core_type = #tpu.core_type<tc>, window_params = [{transform_indices = @transform_0, window_bounds = array<i64: 16, 8>}, {pipeline_mode = #tpu.pipeline_mode<synchronous>, transform_indices = @transform_1, window_bounds = array<i64: 8, 32>}, {pipeline_mode = #tpu.pipeline_mode<synchronous>, transform_indices = @transform_2, window_bounds = array<i64: 1, 32>}, {pipeline_mode = #tpu.pipeline_mode<synchronous>, transform_indices = @transform_3, window_bounds = array<i64: 32, 32>}, {pipeline_mode = #tpu.pipeline_mode<synchronous>, transform_indices = @transform_4, window_bounds = array<i64: 1, 32>}, {pipeline_mode = #tpu.pipeline_mode<synchronous>, transform_indices = @transform_5, window_bounds = array<i64: 32, 32>}, {pipeline_mode = #tpu.pipeline_mode<synchronous>, transform_indices = @transform_6, window_bounds = array<i64: 1, 32>}, {pipeline_mode = #tpu.pipeline_mode<synchronous>, transform_indices = @transform_7, window_bounds = array<i64: 32, 128>}, {pipeline_mode = #tpu.pipeline_mode<synchronous>, transform_indices = @transform_8, window_bounds = array<i64: 1, 128>}, {transform_indices = @transform_9, window_bounds = array<i64: 16, 128>}]} {
    %c0 = arith.constant 0 : index
    %c0_0 = arith.constant 0 : index
    %0 = vector.load %arg1[%c0, %c0_0] : memref<16x8xf32, #tpu.memory_space<vmem>>, vector<16x8xf32>
    %c0_1 = arith.constant 0 : index
    %c0_2 = arith.constant 0 : index
    %1 = vector.load %arg2[%c0_1, %c0_2] : memref<8x32xf32, #tpu.memory_space<vmem>>, vector<8x32xf32>
    %c0_3 = arith.constant 0 : index
    %c0_4 = arith.constant 0 : index
    %2 = vector.load %arg3[%c0_3, %c0_4] : memref<1x32xf32, #tpu.memory_space<vmem>>, vector<1x32xf32>
    %cst = arith.constant dense<0.000000e+00> : vector<16x32xf32>
    %3 = tpu.matmul %0, %1, %cst {dimension_numbers = #tpu.dot_dimension_numbers<[1], [0], [0], [1], [0, 0, 1, 1], [], []>} : vector<16x8xf32>, vector<8x32xf32>, vector<16x32xf32> -> vector<16x32xf32>
    %4 = vector.broadcast %2 : vector<1x32xf32> to vector<16x32xf32>
    %5 = arith.addf %3, %4 : vector<16x32xf32>
    %cst_5 = arith.constant 0.000000e+00 : f32
    %6 = vector.broadcast %cst_5 : f32 to vector<16x32xf32>
    %7 = arith.maximumf %5, %6 : vector<16x32xf32>
    %c0_6 = arith.constant 0 : index
    %c0_7 = arith.constant 0 : index
    %8 = vector.load %arg4[%c0_6, %c0_7] : memref<32x32xf32, #tpu.memory_space<vmem>>, vector<32x32xf32>
    %c0_8 = arith.constant 0 : index
    %c0_9 = arith.constant 0 : index
    %9 = vector.load %arg5[%c0_8, %c0_9] : memref<1x32xf32, #tpu.memory_space<vmem>>, vector<1x32xf32>
    %cst_10 = arith.constant dense<0.000000e+00> : vector<16x32xf32>
    %10 = tpu.matmul %7, %8, %cst_10 {dimension_numbers = #tpu.dot_dimension_numbers<[1], [0], [0], [1], [0, 0, 1, 1], [], []>} : vector<16x32xf32>, vector<32x32xf32>, vector<16x32xf32> -> vector<16x32xf32>
    %11 = vector.broadcast %9 : vector<1x32xf32> to vector<16x32xf32>
    %12 = arith.addf %10, %11 : vector<16x32xf32>
    %cst_11 = arith.constant 0.000000e+00 : f32
    %13 = vector.broadcast %cst_11 : f32 to vector<16x32xf32>
    %14 = arith.maximumf %12, %13 : vector<16x32xf32>
    %c0_12 = arith.constant 0 : index
    %c0_13 = arith.constant 0 : index
    %15 = vector.load %arg6[%c0_12, %c0_13] : memref<32x32xf32, #tpu.memory_space<vmem>>, vector<32x32xf32>
    %c0_14 = arith.constant 0 : index
    %c0_15 = arith.constant 0 : index
    %16 = vector.load %arg7[%c0_14, %c0_15] : memref<1x32xf32, #tpu.memory_space<vmem>>, vector<1x32xf32>
    %cst_16 = arith.constant dense<0.000000e+00> : vector<16x32xf32>
    %17 = tpu.matmul %14, %15, %cst_16 {dimension_numbers = #tpu.dot_dimension_numbers<[1], [0], [0], [1], [0, 0, 1, 1], [], []>} : vector<16x32xf32>, vector<32x32xf32>, vector<16x32xf32> -> vector<16x32xf32>
    %18 = vector.broadcast %16 : vector<1x32xf32> to vector<16x32xf32>
    %19 = arith.addf %17, %18 : vector<16x32xf32>
    %cst_17 = arith.constant 0.000000e+00 : f32
    %20 = vector.broadcast %cst_17 : f32 to vector<16x32xf32>
    %21 = arith.maximumf %19, %20 : vector<16x32xf32>
    %c0_18 = arith.constant 0 : index
    %c0_19 = arith.constant 0 : index
    %22 = vector.load %arg8[%c0_18, %c0_19] : memref<32x128xf32, #tpu.memory_space<vmem>>, vector<32x128xf32>
    %c0_20 = arith.constant 0 : index
    %c0_21 = arith.constant 0 : index
    %23 = vector.load %arg9[%c0_20, %c0_21] : memref<1x128xf32, #tpu.memory_space<vmem>>, vector<1x128xf32>
    %cst_22 = arith.constant dense<0.000000e+00> : vector<16x128xf32>
    %24 = tpu.matmul %21, %22, %cst_22 {dimension_numbers = #tpu.dot_dimension_numbers<[1], [0], [0], [1], [0, 0, 1, 1], [], []>} : vector<16x32xf32>, vector<32x128xf32>, vector<16x128xf32> -> vector<16x128xf32>
    %25 = vector.broadcast %23 : vector<1x128xf32> to vector<16x128xf32>
    %26 = arith.addf %24, %25 : vector<16x128xf32>
    %c0_23 = arith.constant 0 : index
    %c0_24 = arith.constant 0 : index
    %27 = vector.load %arg10[%c0_23, %c0_24] : memref<16x128xf32, #tpu.memory_space<vmem>>, vector<16x128xf32>
    tpu.vector_store %arg10[%c0_23, %c0_24], %26 {strides = array<i32>} : memref<16x128xf32, #tpu.memory_space<vmem>>, vector<16x128xf32>,
    return
  }
  func.func @transform_0(%arg0: i32) -> (i32, i32) {
    %c0_i32 = arith.constant 0 : i32
    %c0_i32_0 = arith.constant 0 : i32
    return %arg0, %c0_i32 : i32, i32
  }
  func.func @transform_1(%arg0: i32) -> (i32, i32) {
    %c0_i32 = arith.constant 0 : i32
    %c0_i32_0 = arith.constant 0 : i32
    %c0_i32_1 = arith.constant 0 : i32
    return %c0_i32, %c0_i32_0 : i32, i32
  }
  func.func @transform_2(%arg0: i32) -> (i32, i32) {
    %c0_i32 = arith.constant 0 : i32
    %c0_i32_0 = arith.constant 0 : i32
    %c0_i32_1 = arith.constant 0 : i32
    return %c0_i32, %c0_i32_0 : i32, i32
  }
  func.func @transform_3(%arg0: i32) -> (i32, i32) {
    %c0_i32 = arith.constant 0 : i32
    %c0_i32_0 = arith.constant 0 : i32
    %c0_i32_1 = arith.constant 0 : i32
    return %c0_i32, %c0_i32_0 : i32, i32
  }
  func.func @transform_4(%arg0: i32) -> (i32, i32) {
    %c0_i32 = arith.constant 0 : i32
    %c0_i32_0 = arith.constant 0 : i32
    %c0_i32_1 = arith.constant 0 : i32
    return %c0_i32, %c0_i32_0 : i32, i32
  }
  func.func @transform_5(%arg0: i32) -> (i32, i32) {
    %c0_i32 = arith.constant 0 : i32
    %c0_i32_0 = arith.constant 0 : i32
    %c0_i32_1 = arith.constant 0 : i32
    return %c0_i32, %c0_i32_0 : i32, i32
  }
  func.func @transform_6(%arg0: i32) -> (i32, i32) {
    %c0_i32 = arith.constant 0 : i32
    %c0_i32_0 = arith.constant 0 : i32
    %c0_i32_1 = arith.constant 0 : i32
    return %c0_i32, %c0_i32_0 : i32, i32
  }
  func.func @transform_7(%arg0: i32) -> (i32, i32) {
    %c0_i32 = arith.constant 0 : i32
    %c0_i32_0 = arith.constant 0 : i32
    %c0_i32_1 = arith.constant 0 : i32
    return %c0_i32, %c0_i32_0 : i32, i32
  }
  func.func @transform_8(%arg0: i32) -> (i32, i32) {
    %c0_i32 = arith.constant 0 : i32
    %c0_i32_0 = arith.constant 0 : i32
    %c0_i32_1 = arith.constant 0 : i32
    return %c0_i32, %c0_i32_0 : i32, i32
  }
  func.func @transform_9(%arg0: i32) -> (i32, i32) {
    %c0_i32 = arith.constant 0 : i32
    %c0_i32_0 = arith.constant 0 : i32
    return %arg0, %c0_i32 : i32, i32
  }
}

</mosaic_0001>

<llo_original>
// kernel: trunknet_forward.1
$region0: #{trunknet_forward.1}
  #allocation0 [shape = 'u32[]', space=smem, size = 0x4, offset = 0x4, fixed_abs, tag = 'smem constant byte address 0x4 - core index']
  #allocation1 [shape = 'u32[144,128]{1,0:T(1,128)}', space=vmem, size = 0x12000, scoped, tag = 'internal scratch']
  %s0 = inlined_call_operand.vmem [shape: f32[48,8], index: 0, kind: input, shape index: {}]
  %s1 = inlined_call_operand.vmem [shape: f32[8,32], index: 1, kind: input, shape index: {}]
  %s2 = inlined_call_operand.vmem [shape: f32[1,32], index: 2, kind: input, shape index: {}]
  %s3 = inlined_call_operand.vmem [shape: f32[32,32], index: 3, kind: input, shape index: {}]
  %s4 = inlined_call_operand.vmem [shape: f32[1,32], index: 4, kind: input, shape index: {}]
  %s5 = inlined_call_operand.vmem [shape: f32[32,32], index: 5, kind: input, shape index: {}]
  %s6 = inlined_call_operand.vmem [shape: f32[1,32], index: 6, kind: input, shape index: {}]
  %s7 = inlined_call_operand.vmem [shape: f32[32,128], index: 7, kind: input, shape index: {}]
  %s8 = inlined_call_operand.vmem [shape: f32[1,128], index: 8, kind: input, shape index: {}]
  %s9 = inlined_call_operand.vmem [shape: f32[48,128], index: 9, kind: output, shape index: {}]
  %s10 = sld [smem:[#allocation0]]
  $region69: #{trunknet_forward.1} parent=0
    _
  %s12 = ssub.s32 1, %s10
  %s13 = scalar_select 0, %s12, %s10
  loop: start=0, step=1, limit=5
  $region2: #{trunknet_forward.1} parent=0 // loop_pre_header
    _
  $region3: #{trunknet_forward.1} parent=0 // loop_header
    %s15 = sphi 0, %s19
    %p16 = scmp.ge.s32.totalorder %s15, 5
    %s25 = sphi 0, %s27
    %s28 = sphi 0, %s25
    %s29 = sphi 0, %s28
    %s45 = sphi 0, %s29
    %s49 = sphi 0, %s49
    %s51 = sphi 0, %s49
    %s52 = sphi 0, %s51
    %s66 = sphi 0, %s52
    %s70 = sphi 0, %s70
    %s72 = sphi 0, %s70
    %s73 = sphi 0, %s72
    %s87 = sphi 0, %s73
    %s91 = sphi 0, %s91
    %s93 = sphi 0, %s91
    %s94 = sphi 0, %s93
    %s108 = sphi 0, %s94
    %s112 = sphi 0, %s112
    %s114 = sphi 0, %s112
    %s115 = sphi 0, %s114
    %s129 = sphi 0, %s115
    %s133 = sphi 0, %s133
    %s135 = sphi 0, %s133
    %s136 = sphi 0, %s135
    %s150 = sphi 0, %s136
    %s154 = sphi 0, %s154
    %s156 = sphi 0, %s154
    %s157 = sphi 0, %s156
    %s171 = sphi 0, %s157
    %s175 = sphi 0, %s175
    %s177 = sphi 0, %s175
    %s178 = sphi 0, %s177
    %s192 = sphi 0, %s178
    %s196 = sphi 0, %s196
    %s198 = sphi 0, %s196
    %s199 = sphi 0, %s198
    %s213 = sphi 0, %s199
    %s219 = sphi 0, %s221
    %s222 = sphi 0, %s219
    %s223 = sphi 0, %s222
    %s239 = sphi 0, %s223
  $region4: #{trunknet_forward.1} parent=0 // loop_header_branch
    %18 = sbr.rel (%p16) target = $region8
  $region5: #{trunknet_forward.1} parent=0 // loop_body
    %s20 = ssub.s32 %s15, 1
    %s21 = ssub.s32 %s15, 2
    %s22 = sadd.s32 %s15, 1
    %s23 = ssub.s32 %s15, %s22
    %p24 = scmp.eq.s32.totalorder %s23, 0
    %s26 = sadd.s32 %s25, 1
    %s27 = scalar_select %p24, %s25, %s26
    %p30 = pneg %p24
    %p31 = scmp.eq.s32.totalorder %s15, 2
    %p32 = por %p30, %p31
    %p33 = scmp.ne.s32.totalorder %s25, %s28
    %p34 = scmp.eq.s32.totalorder %s15, 0
    %p35 = por %p33, %p34
    %p36 = scmp.ne.s32.totalorder %s25, %s28
    %p37 = scmp.eq.s32.totalorder %s20, 2
    %p38 = por %p36, %p37
    %p39 = scmp.ne.s32.totalorder %s28, %s29
    %p40 = scmp.eq.s32.totalorder %s20, 0
    %p41 = por %p39, %p40
    %p42 = scmp.ne.s32.totalorder %s28, %s29
    %p43 = scmp.eq.s32.totalorder %s21, 2
    %p44 = por %p42, %p43
    %p46 = scmp.ne.s32.totalorder %s29, %s45
    %p47 = scmp.eq.s32.totalorder %s21, 0
    %p48 = por %p46, %p47
    %s50 = sadd.s32 %s49, 1
    %p53 = scmp.eq.s32.totalorder %s15, 2
    %p54 = scmp.ne.s32.totalorder %s49, %s51
    %p55 = scmp.eq.s32.totalorder %s15, 0
    %p56 = por %p54, %p55
    %p57 = scmp.ne.s32.totalorder %s49, %s51
    %p58 = scmp.eq.s32.totalorder %s20, 2
    %p59 = por %p57, %p58
    %p60 = scmp.ne.s32.totalorder %s51, %s52
    %p61 = scmp.eq.s32.totalorder %s20, 0
    %p62 = por %p60, %p61
    %p63 = scmp.ne.s32.totalorder %s51, %s52
    %p64 = scmp.eq.s32.totalorder %s21, 2
    %p65 = por %p63, %p64
    %p67 = scmp.ne.s32.totalorder %s52, %s66
    %p68 = scmp.eq.s32.totalorder %s21, 0
    %p69 = por %p67, %p68
    %s71 = sadd.s32 %s70, 1
    %p74 = scmp.eq.s32.totalorder %s15, 2
    %p75 = scmp.ne.s32.totalorder %s70, %s72
    %p76 = scmp.eq.s32.totalorder %s15, 0
    %p77 = por %p75, %p76
    %p78 = scmp.ne.s32.totalorder %s70, %s72
    %p79 = scmp.eq.s32.totalorder %s20, 2
    %p80 = por %p78, %p79
    %p81 = scmp.ne.s32.totalorder %s72, %s73
    %p82 = scmp.eq.s32.totalorder %s20, 0
    %p83 = por %p81, %p82
    %p84 = scmp.ne.s32.totalorder %s72, %s73
    %p85 = scmp.eq.s32.totalorder %s21, 2
    %p86 = por %p84, %p85
    %p88 = scmp.ne.s32.totalorder %s73, %s87
    %p89 = scmp.eq.s32.totalorder %s21, 0
    %p90 = por %p88, %p89
    %s92 = sadd.s32 %s91, 1
    %p95 = scmp.eq.s32.totalorder %s15, 2
    %p96 = scmp.ne.s32.totalorder %s91, %s93
    %p97 = scmp.eq.s32.totalorder %s15, 0
    %p98 = por %p96, %p97
    %p99 = scmp.ne.s32.totalorder %s91, %s93
    %p100 = scmp.eq.s32.totalorder %s20, 2
    %p101 = por %p99, %p100
    %p102 = scmp.ne.s32.totalorder %s93, %s94
    %p103 = scmp.eq.s32.totalorder %s20, 0
    %p104 = por %p102, %p103
    %p105 = scmp.ne.s32.totalorder %s93, %s94
    %p106 = scmp.eq.s32.totalorder %s21, 2
    %p107 = por %p105, %p106
    %p109 = scmp.ne.s32.totalorder %s94, %s108
    %p110 = scmp.eq.s32.totalorder %s21, 0
    %p111 = por %p109, %p110
    %s113 = sadd.s32 %s112, 1
    %p116 = scmp.eq.s32.totalorder %s15, 2
    %p117 = scmp.ne.s32.totalorder %s112, %s114
    %p118 = scmp.eq.s32.totalorder %s15, 0
    %p119 = por %p117, %p118
    %p120 = scmp.ne.s32.totalorder %s112, %s114
    %p121 = scmp.eq.s32.totalorder %s20, 2
    %p122 = por %p120, %p121
    %p123 = scmp.ne.s32.totalorder %s114, %s115
    %p124 = scmp.eq.s32.totalorder %s20, 0
    %p125 = por %p123, %p124
    %p126 = scmp.ne.s32.totalorder %s114, %s115
    %p127 = scmp.eq.s32.totalorder %s21, 2
    %p128 = por %p126, %p127
    %p130 = scmp.ne.s32.totalorder %s115, %s129
    %p131 = scmp.eq.s32.totalorder %s21, 0
    %p132 = por %p130, %p131
    %s134 = sadd.s32 %s133, 1
    %p137 = scmp.eq.s32.totalorder %s15, 2
    %p138 = scmp.ne.s32.totalorder %s133, %s135
    %p139 = scmp.eq.s32.totalorder %s15, 0
    %p140 = por %p138, %p139
    %p141 = scmp.ne.s32.totalorder %s133, %s135
    %p142 = scmp.eq.s32.totalorder %s20, 2
    %p143 = por %p141, %p142
    %p144 = scmp.ne.s32.totalorder %s135, %s136
    %p145 = scmp.eq.s32.totalorder %s20, 0
    %p146 = por %p144, %p145
    %p147 = scmp.ne.s32.totalorder %s135, %s136
    %p148 = scmp.eq.s32.totalorder %s21, 2
    %p149 = por %p147, %p148
    %p151 = scmp.ne.s32.totalorder %s136, %s150
    %p152 = scmp.eq.s32.totalorder %s21, 0
    %p153 = por %p151, %p152
    %s155 = sadd.s32 %s154, 1
    %p158 = scmp.eq.s32.totalorder %s15, 2
    %p159 = scmp.ne.s32.totalorder %s154, %s156
    %p160 = scmp.eq.s32.totalorder %s15, 0
    %p161 = por %p159, %p160
    %p162 = scmp.ne.s32.totalorder %s154, %s156
    %p163 = scmp.eq.s32.totalorder %s20, 2
    %p164 = por %p162, %p163
    %p165 = scmp.ne.s32.totalorder %s156, %s157
    %p166 = scmp.eq.s32.totalorder %s20, 0
    %p167 = por %p165, %p166
    %p168 = scmp.ne.s32.totalorder %s156, %s157
    %p169 = scmp.eq.s32.totalorder %s21, 2
    %p170 = por %p168, %p169
    %p172 = scmp.ne.s32.totalorder %s157, %s171
    %p173 = scmp.eq.s32.totalorder %s21, 0
    %p174 = por %p172, %p173
    %s176 = sadd.s32 %s175, 1
    %p179 = scmp.eq.s32.totalorder %s15, 2
    %p180 = scmp.ne.s32.totalorder %s175, %s177
    %p181 = scmp.eq.s32.totalorder %s15, 0
    %p182 = por %p180, %p181
    %p183 = scmp.ne.s32.totalorder %s175, %s177
    %p184 = scmp.eq.s32.totalorder %s20, 2
    %p185 = por %p183, %p184
    %p186 = scmp.ne.s32.totalorder %s177, %s178
    %p187 = scmp.eq.s32.totalorder %s20, 0
    %p188 = por %p186, %p187
    %p189 = scmp.ne.s32.totalorder %s177, %s178
    %p190 = scmp.eq.s32.totalorder %s21, 2
    %p191 = por %p189, %p190
    %p193 = scmp.ne.s32.totalorder %s178, %s192
    %p194 = scmp.eq.s32.totalorder %s21, 0
    %p195 = por %p193, %p194
    %s197 = sadd.s32 %s196, 1
    %p200 = scmp.eq.s32.totalorder %s15, 2
    %p201 = scmp.ne.s32.totalorder %s196, %s198
    %p202 = scmp.eq.s32.totalorder %s15, 0
    %p203 = por %p201, %p202
    %p204 = scmp.ne.s32.totalorder %s196, %s198
    %p205 = scmp.eq.s32.totalorder %s20, 2
    %p206 = por %p204, %p205
    %p207 = scmp.ne.s32.totalorder %s198, %s199
    %p208 = scmp.eq.s32.totalorder %s20, 0
    %p209 = por %p207, %p208
    %p210 = scmp.ne.s32.totalorder %s198, %s199
    %p211 = scmp.eq.s32.totalorder %s21, 2
    %p212 = por %p210, %p211
    %p214 = scmp.ne.s32.totalorder %s199, %s213
    %p215 = scmp.eq.s32.totalorder %s21, 0
    %p216 = por %p214, %p215
    %s217 = ssub.s32 %s15, %s22
    %p218 = scmp.eq.s32.totalorder %s217, 0
    %s220 = sadd.s32 %s219, 1
    %s221 = scalar_select %p218, %s219, %s220
    %p224 = pneg %p218
    %p225 = scmp.eq.s32.totalorder %s15, 2
    %p226 = por %p224, %p225
    %p227 = scmp.ne.s32.totalorder %s219, %s222
    %p228 = scmp.eq.s32.totalorder %s15, 0
    %p229 = por %p227, %p228
    %p230 = scmp.ne.s32.totalorder %s219, %s222
    %p231 = scmp.eq.s32.totalorder %s20, 2
    %p232 = por %p230, %p231
    %p233 = scmp.ne.s32.totalorder %s222, %s223
    %p234 = scmp.eq.s32.totalorder %s20, 0
    %p235 = por %p233, %p234
    %p236 = scmp.ne.s32.totalorder %s222, %s223
    %p237 = scmp.eq.s32.totalorder %s21, 2
    %p238 = por %p236, %p237
    %p240 = scmp.ne.s32.totalorder %s223, %s239
    %p241 = scmp.eq.s32.totalorder %s21, 0
    %p242 = por %p240, %p241
    %p243 = scmp.le.s32.totalorder 1, %s15
    %p244 = scmp.lt.s32.totalorder %s15, 4
    %p245 = pnand %p243, %p244
    %p246 = pneg %p245
    // Predicated region
    $region9: #{trunknet_forward.1} parent=5 // pred_check
      _
    $region10: #{trunknet_forward.1} parent=5 // pred_check_branch
      %248 = sbr.rel (%p245) target = $region12
    $region11: #{trunknet_forward.1} parent=5 // pred_region
      %s249 = ssub.s32 %s15, 1
      // Predicated region
      $region13: #{trunknet_forward.1} parent=11 // pred_check
        %p250 = pneg %p62
      $region14: #{trunknet_forward.1} parent=11 // pred_check_branch
        %252 = sbr.rel (%p250) target = $region16
      $region15: #{trunknet_forward.1} parent=11 // pred_region
        _
      $region16: #{trunknet_forward.1} parent=11 // pred_fallthru
        _
      // Predicated region
      $region17: #{trunknet_forward.1} parent=11 // pred_check
        %p253 = pneg %p83
      $region18: #{trunknet_forward.1} parent=11 // pred_check_branch
        %255 = sbr.rel (%p253) target = $region20
      $region19: #{trunknet_forward.1} parent=11 // pred_region
        _
      $region20: #{trunknet_forward.1} parent=11 // pred_fallthru
        _
      // Predicated region
      $region21: #{trunknet_forward.1} parent=11 // pred_check
        %p256 = pneg %p104
      $region22: #{trunknet_forward.1} parent=11 // pred_check_branch
        %258 = sbr.rel (%p256) target = $region24
      $region23: #{trunknet_forward.1} parent=11 // pred_region
        _
      $region24: #{trunknet_forward.1} parent=11 // pred_fallthru
        _
      // Predicated region
      $region25: #{trunknet_forward.1} parent=11 // pred_check
        %p259 = pneg %p125
      $region26: #{trunknet_forward.1} parent=11 // pred_check_branch
        %261 = sbr.rel (%p259) target = $region28
      $region27: #{trunknet_forward.1} parent=11 // pred_region
        _
      $region28: #{trunknet_forward.1} parent=11 // pred_fallthru
        _
      // Predicated region
      $region29: #{trunknet_forward.1} parent=11 // pred_check
        %p262 = pneg %p146
      $region30: #{trunknet_forward.1} parent=11 // pred_check_branch
        %264 = sbr.rel (%p262) target = $region32
      $region31: #{trunknet_forward.1} parent=11 // pred_region
        _
      $region32: #{trunknet_forward.1} parent=11 // pred_fallthru
        _
      // Predicated region
      $region33: #{trunknet_forward.1} parent=11 // pred_check
        %p265 = pneg %p167
      $region34: #{trunknet_forward.1} parent=11 // pred_check_branch
        %267 = sbr.rel (%p265) target = $region36
      $region35: #{trunknet_forward.1} parent=11 // pred_region
        _
      $region36: #{trunknet_forward.1} parent=11 // pred_fallthru
        _
      // Predicated region
      $region37: #{trunknet_forward.1} parent=11 // pred_check
        %p268 = pneg %p188
      $region38: #{trunknet_forward.1} parent=11 // pred_check_branch
        %270 = sbr.rel (%p268) target = $region40
      $region39: #{trunknet_forward.1} parent=11 // pred_region
        _
      $region40: #{trunknet_forward.1} parent=11 // pred_fallthru
        _
      // Predicated region
      $region41: #{trunknet_forward.1} parent=11 // pred_check
        %p271 = pneg %p209
      $region42: #{trunknet_forward.1} parent=11 // pred_check_branch
        %273 = sbr.rel (%p271) target = $region44
      $region43: #{trunknet_forward.1} parent=11 // pred_region
        _
      $region44: #{trunknet_forward.1} parent=11 // pred_fallthru
        _
    $region12: #{trunknet_forward.1} parent=5 // pred_fallthru
      _
    %p274 = scmp.lt.s32.totalorder %s15, 3
    // Predicated region
    $region45: #{trunknet_forward.1} parent=5 // pred_check
      %p275 = pneg %p274
    $region46: #{trunknet_forward.1} parent=5 // pred_check_branch
      %277 = sbr.rel (%p275) target = $region48
    $region47: #{trunknet_forward.1} parent=5 // pred_region
      // Predicated region
      $region49: #{trunknet_forward.1} parent=47 // pred_check
        %p278 = pneg %p35
      $region50: #{trunknet_forward.1} parent=47 // pred_check_branch
        %280 = sbr.rel (%p278) target = $region52
      $region51: #{trunknet_forward.1} parent=47 // pred_region
        %s281 = smul.u32 2, %s15
        %p282 = scmp.lt.s32.totalorder %s281, 5
        %s283 = scalar_select %p282, %s281, 5
        %s284 = smul.addr %s283, 8
        %s285 = scalar_lea.vmem %s0, %s284
        %s286 = smul.u32 2, %s15
      $region52: #{trunknet_forward.1} parent=47 // pred_fallthru
        _
    $region48: #{trunknet_forward.1} parent=5 // pred_fallthru
      _
    %p287 = scmp.le.s32.totalorder 1, %s15
    %p288 = scmp.lt.s32.totalorder %s15, 4
    %p289 = pnand %p287, %p288
    %p290 = pneg %p289
    // Predicated region
    $region53: #{trunknet_forward.1} parent=5 // pred_check
      _
    $region54: #{trunknet_forward.1} parent=5 // pred_check_branch
      %292 = sbr.rel (%p289) target = $region56
    $region55: #{trunknet_forward.1} parent=5 // pred_region
      %s293 = ssub.s32 %s15, 1
      %s294 = smul.u32 2, %s20
      %p295 = scmp.lt.s32.totalorder %s294, 5
      %s296 = scalar_select %p295, %s294, 5
      %s297 = smul.addr %s296, 8
      %s298 = scalar_lea.vmem %s0, %s297
      %p299 = pneg %p41
      %p300 = pneg %p38
      %p301 = pneg %p62
      %p302 = pneg %p59
      %p303 = pneg %p83
      %p304 = pneg %p80
      %p305 = pneg %p104
      %p306 = pneg %p101
      %p307 = pneg %p125
      %p308 = pneg %p122
      %p309 = pneg %p146
      %p310 = pneg %p143
      %p311 = pneg %p167
      %p312 = pneg %p164
      %p313 = pneg %p188
      %p314 = pneg %p185
      %p315 = pneg %p209
      %p316 = pneg %p206
      %p317 = pneg %p235
      %p318 = pneg %p232
      %s319 = smul.u32 2, %s20
      %p320 = scmp.lt.s32.totalorder %s319, 5
      %s321 = scalar_select %p320, %s319, 5
      %s322 = smul.addr %s321, 8
      %s323 = scalar_lea.vmem %s9, %s322
      %s324 = smul.u32 2, %s20
      %p325 = scmp.lt.s32.totalorder %s324, 5
      %s326 = scalar_select %p325, %s324, 5
      %s327 = smul.addr %s326, 8
      %s328 = scalar_lea.vmem %s0, %s327
      %s329 = smul.u32 2, %s20
      %s330 = smul.u32 2, %s20
      %p331 = scmp.lt.s32.totalorder %s330, 5
      %s332 = scalar_select %p331, %s330, 5
      %s333 = smul.addr %s332, 8
      %s334 = scalar_lea.vmem %s9, %s333
      %s335 = smul.u32 2, %s20
      %v336 = vld [vmem:[%s328] sm:$0xff]
      %v337 = vld [vmem:[%s328 + $0x8] sm:$0xff]
      %v338 = vld [vmem:[%s1] sm:$0xff]
      %v339 = vld [vmem:[%s2] sm:$0x1]
      %v341 = vlaneseq
      %v342 = vshrl.u32 %v341, 7
      %v343 = vsub.s32 0, %v342
      %v344 = vrot.slane %v339, %v343
      %vm346 = vcmask 64512
      %v348 = vsel %vm346, %v336, 0
      %v351 = vsel %vm346, %v337, 0
      %353 = vmatprep.subr.mxu0 0.0
      %354 = vmatpush1.msra.mxu0 0.0
      %355 = vmatprep.subr.mxu0 0.0
      %356 = vmatpush1.msra.mxu0 0.0
      %357 = vmatprep.subr.mxu0 0.0
      %358 = vmatpush1.msra.mxu0 0.0
      %359 = vmatprep.subr.mxu0 0.0
      %360 = vmatpush1.msra.mxu0 0.0
      %361 = vmatprep.subr.mxu0 0.0
      %362 = vmatpush1.msra.mxu0 0.0
      %363 = vmatprep.subr.mxu0 0.0
      %364 = vmatpush1.msra.mxu0 0.0
      %365 = vmatprep.subr.mxu0 0.0
      %366 = vmatpush1.msra.mxu0 0.0
      %367 = vmatprep.subr.mxu0 0.0
      %368 = vmatpush1.msra.mxu0 0.0
      %369 = vmatprep.subr.mxu0 0.0
      %370 = vmatpush1.msra.mxu0 0.0
      %371 = vmatprep.subr.mxu0 0.0
      %372 = vmatpush1.msra.mxu0 0.0
      %373 = vmatprep.subr.mxu0 0.0
      %374 = vmatpush1.msra.mxu0 0.0
      %375 = vmatprep.subr.mxu0 0.0
      %376 = vmatpush1.msra.mxu0 0.0
      %377 = vmatprep.subr.mxu0 0.0
      %378 = vmatpush1.msra.mxu0 0.0
      %379 = vmatprep.subr.mxu0 0.0
      %380 = vmatpush1.msra.mxu0 0.0
      %381 = vmatprep.subr.mxu0 0.0
      %382 = vmatpush1.msra.mxu0 0.0
      %383 = vmatprep.subr.mxu0 0.0
      %384 = vmatpush1.msra.mxu0 %v338
      %385 = vmatprep.subr.mxu0 0.0
      %386 = vmatpush2.msra.mxu0 0.0
      %387 = vmatprep.subr.mxu0 0.0
      %388 = vmatpush2.msra.mxu0 0.0
      %389 = vmatprep.subr.mxu0 0.0
      %390 = vmatpush2.msra.mxu0 0.0
      %391 = vmatprep.subr.mxu0 0.0
      %392 = vmatpush2.msra.mxu0 0.0
      %393 = vmatprep.subr.mxu0 0.0
      %394 = vmatpush2.msra.mxu0 0.0
      %395 = vmatprep.subr.mxu0 0.0
      %396 = vmatpush2.msra.mxu0 0.0
      %397 = vmatprep.subr.mxu0 0.0
      %398 = vmatpush2.msra.mxu0 0.0
      %399 = vmatprep.subr.mxu0 0.0
      %400 = vmatpush2.msra.mxu0 0.0
      %401 = vmatprep.subr.mxu0 0.0
      %402 = vmatpush2.msra.mxu0 0.0
      %403 = vmatprep.subr.mxu0 0.0
      %404 = vmatpush2.msra.mxu0 0.0
      %405 = vmatprep.subr.mxu0 0.0
      %406 = vmatpush2.msra.mxu0 0.0
      %407 = vmatprep.subr.mxu0 0.0
      %408 = vmatpush2.msra.mxu0 0.0
      %409 = vmatprep.subr.mxu0 0.0
      %410 = vmatpush2.msra.mxu0 0.0
      %411 = vmatprep.subr.mxu0 0.0
      %412 = vmatpush2.msra.mxu0 0.0
      %413 = vmatprep.subr.mxu0 0.0
      %414 = vmatpush2.msra.mxu0 0.0
      %415 = vmatprep.subr.mxu0 0.0
      %416 = vmatpush2.msra.mxu0 0.0
      %417 = vmatprep.mubr.f32.mxu0 0.0
      %418 = vmatmul.mubr.f32.gmra.mxu0 %v348
      %v419 = vpop.f32.mrf.mxu0
      %v420 = vadd.f32 %v344, %v419
      %v421 = vpop.f32.mrf.mxu0
      %422 = vmatprep.mubr.f32.mxu0 0.0
      %423 = vmatmul.mubr.f32.gmra.mxu0 %v351
      %v424 = vpop.f32.mrf.mxu0
      %v425 = vadd.f32 %v344, %v424
      %v426 = vpop.f32.mrf.mxu0
      %427 = vdwg.mxu0
      %v428 = vmax.f32 %v420, 0.0
      %v429 = vmax.f32 %v425, 0.0
      %v430 = vld [vmem:[%s3] sm:$0xff]
      %v431 = vld [vmem:[%s3 + $0x8] sm:$0xff]
      %v432 = vld [vmem:[%s3 + $0x10] sm:$0xff]
      %v433 = vld [vmem:[%s3 + $0x18] sm:$0xff]
      %v434 = vld [vmem:[%s4] sm:$0x1]
      %v436 = vlaneseq
      %v437 = vshrl.u32 %v436, 7
      %v438 = vsub.s32 0, %v437
      %v439 = vrot.slane %v434, %v438
      %vm441 = vcmask 261120
      %v443 = vsel %vm441, %v428, 0
      %v446 = vsel %vm441, %v429, 0
      %448 = vmatprep.subr.mxu0 0.0
      %449 = vmatpush1.msra.mxu0 0.0
      %450 = vmatprep.subr.mxu0 0.0
      %451 = vmatpush1.msra.mxu0 0.0
      %452 = vmatprep.subr.mxu0 0.0
      %453 = vmatpush1.msra.mxu0 0.0
      %454 = vmatprep.subr.mxu0 0.0
      %455 = vmatpush1.msra.mxu0 0.0
      %456 = vmatprep.subr.mxu0 0.0
      %457 = vmatpush1.msra.mxu0 0.0
      %458 = vmatprep.subr.mxu0 0.0
      %459 = vmatpush1.msra.mxu0 0.0
      %460 = vmatprep.subr.mxu0 0.0
      %461 = vmatpush1.msra.mxu0 0.0
      %462 = vmatprep.subr.mxu0 0.0
      %463 = vmatpush1.msra.mxu0 0.0
      %464 = vmatprep.subr.mxu0 0.0
      %465 = vmatpush1.msra.mxu0 0.0
      %466 = vmatprep.subr.mxu0 0.0
      %467 = vmatpush1.msra.mxu0 0.0
      %468 = vmatprep.subr.mxu0 0.0
      %469 = vmatpush1.msra.mxu0 0.0
      %470 = vmatprep.subr.mxu0 0.0
      %471 = vmatpush1.msra.mxu0 0.0
      %472 = vmatprep.subr.mxu0 0.0
      %473 = vmatpush1.msra.mxu0 %v433
      %474 = vmatprep.subr.mxu0 0.0
      %475 = vmatpush1.msra.mxu0 %v432
      %476 = vmatprep.subr.mxu0 0.0
      %477 = vmatpush1.msra.mxu0 %v431
      %478 = vmatprep.subr.mxu0 0.0
      %479 = vmatpush1.msra.mxu0 %v430
      %480 = vmatprep.subr.mxu0 0.0
      %481 = vmatpush2.msra.mxu0 0.0
      %482 = vmatprep.subr.mxu0 0.0
      %483 = vmatpush2.msra.mxu0 0.0
      %484 = vmatprep.subr.mxu0 0.0
      %485 = vmatpush2.msra.mxu0 0.0
      %486 = vmatprep.subr.mxu0 0.0
      %487 = vmatpush2.msra.mxu0 0.0
      %488 = vmatprep.subr.mxu0 0.0
      %489 = vmatpush2.msra.mxu0 0.0
      %490 = vmatprep.subr.mxu0 0.0
      %491 = vmatpush2.msra.mxu0 0.0
      %492 = vmatprep.subr.mxu0 0.0
      %493 = vmatpush2.msra.mxu0 0.0
      %494 = vmatprep.subr.mxu0 0.0
      %495 = vmatpush2.msra.mxu0 0.0
      %496 = vmatprep.subr.mxu0 0.0
      %497 = vmatpush2.msra.mxu0 0.0
      %498 = vmatprep.subr.mxu0 0.0
      %499 = vmatpush2.msra.mxu0 0.0
      %500 = vmatprep.subr.mxu0 0.0
      %501 = vmatpush2.msra.mxu0 0.0
      %502 = vmatprep.subr.mxu0 0.0
      %503 = vmatpush2.msra.mxu0 0.0
      %504 = vmatprep.subr.mxu0 0.0
      %505 = vmatpush2.msra.mxu0 0.0
      %506 = vmatprep.subr.mxu0 0.0
      %507 = vmatpush2.msra.mxu0 0.0
      %508 = vmatprep.subr.mxu0 0.0
      %509 = vmatpush2.msra.mxu0 0.0
      %510 = vmatprep.subr.mxu0 0.0
      %511 = vmatpush2.msra.mxu0 0.0
      %512 = vmatprep.mubr.f32.mxu0 0.0
      %513 = vmatmul.mubr.f32.gmra.mxu0 %v443
      %v514 = vpop.f32.mrf.mxu0
      %v515 = vadd.f32 %v439, %v514
      %v516 = vpop.f32.mrf.mxu0
      %517 = vmatprep.mubr.f32.mxu0 0.0
      %518 = vmatmul.mubr.f32.gmra.mxu0 %v446
      %v519 = vpop.f32.mrf.mxu0
      %v520 = vadd.f32 %v439, %v519
      %v521 = vpop.f32.mrf.mxu0
      %522 = vdwg.mxu0
      %v523 = vmax.f32 %v515, 0.0
      %v524 = vmax.f32 %v520, 0.0
      %v525 = vld [vmem:[%s5] sm:$0xff]
      %v526 = vld [vmem:[%s5 + $0x8] sm:$0xff]
      %v527 = vld [vmem:[%s5 + $0x10] sm:$0xff]
      %v528 = vld [vmem:[%s5 + $0x18] sm:$0xff]
      %v529 = vld [vmem:[%s6] sm:$0x1]
      %v531 = vlaneseq
      %v532 = vshrl.u32 %v531, 7
      %v533 = vsub.s32 0, %v532
      %v534 = vrot.slane %v529, %v533
      %v537 = vsel %vm441, %v523, 0
      %v540 = vsel %vm441, %v524, 0
      %542 = vmatprep.subr.mxu0 0.0
      %543 = vmatpush1.msra.mxu0 0.0
      %544 = vmatprep.subr.mxu0 0.0
      %545 = vmatpush1.msra.mxu0 0.0
      %546 = vmatprep.subr.mxu0 0.0
      %547 = vmatpush1.msra.mxu0 0.0
      %548 = vmatprep.subr.mxu0 0.0
      %549 = vmatpush1.msra.mxu0 0.0
      %550 = vmatprep.subr.mxu0 0.0
      %551 = vmatpush1.msra.mxu0 0.0
      %552 = vmatprep.subr.mxu0 0.0
      %553 = vmatpush1.msra.mxu0 0.0
      %554 = vmatprep.subr.mxu0 0.0
      %555 = vmatpush1.msra.mxu0 0.0
      %556 = vmatprep.subr.mxu0 0.0
      %557 = vmatpush1.msra.mxu0 0.0
      %558 = vmatprep.subr.mxu0 0.0
      %559 = vmatpush1.msra.mxu0 0.0
      %560 = vmatprep.subr.mxu0 0.0
      %561 = vmatpush1.msra.mxu0 0.0
      %562 = vmatprep.subr.mxu0 0.0
      %563 = vmatpush1.msra.mxu0 0.0
      %564 = vmatprep.subr.mxu0 0.0
      %565 = vmatpush1.msra.mxu0 0.0
      %566 = vmatprep.subr.mxu0 0.0
      %567 = vmatpush1.msra.mxu0 %v528
      %568 = vmatprep.subr.mxu0 0.0
      %569 = vmatpush1.msra.mxu0 %v527
      %570 = vmatprep.subr.mxu0 0.0
      %571 = vmatpush1.msra.mxu0 %v526
      %572 = vmatprep.subr.mxu0 0.0
      %573 = vmatpush1.msra.mxu0 %v525
      %574 = vmatprep.subr.mxu0 0.0
      %575 = vmatpush2.msra.mxu0 0.0
      %576 = vmatprep.subr.mxu0 0.0
      %577 = vmatpush2.msra.mxu0 0.0
      %578 = vmatprep.subr.mxu0 0.0
      %579 = vmatpush2.msra.mxu0 0.0
      %580 = vmatprep.subr.mxu0 0.0
      %581 = vmatpush2.msra.mxu0 0.0
      %582 = vmatprep.subr.mxu0 0.0
      %583 = vmatpush2.msra.mxu0 0.0
      %584 = vmatprep.subr.mxu0 0.0
      %585 = vmatpush2.msra.mxu0 0.0
      %586 = vmatprep.subr.mxu0 0.0
      %587 = vmatpush2.msra.mxu0 0.0
      %588 = vmatprep.subr.mxu0 0.0
      %589 = vmatpush2.msra.mxu0 0.0
      %590 = vmatprep.subr.mxu0 0.0
      %591 = vmatpush2.msra.mxu0 0.0
      %592 = vmatprep.subr.mxu0 0.0
      %593 = vmatpush2.msra.mxu0 0.0
      %594 = vmatprep.subr.mxu0 0.0
      %595 = vmatpush2.msra.mxu0 0.0
      %596 = vmatprep.subr.mxu0 0.0
      %597 = vmatpush2.msra.mxu0 0.0
      %598 = vmatprep.subr.mxu0 0.0
      %599 = vmatpush2.msra.mxu0 0.0
      %600 = vmatprep.subr.mxu0 0.0
      %601 = vmatpush2.msra.mxu0 0.0
      %602 = vmatprep.subr.mxu0 0.0
      %603 = vmatpush2.msra.mxu0 0.0
      %604 = vmatprep.subr.mxu0 0.0
      %605 = vmatpush2.msra.mxu0 0.0
      %606 = vmatprep.mubr.f32.mxu0 0.0
      %607 = vmatmul.mubr.f32.gmra.mxu0 %v537
      %v608 = vpop.f32.mrf.mxu0
      %v609 = vadd.f32 %v534, %v608
      %v610 = vpop.f32.mrf.mxu0
      %611 = vmatprep.mubr.f32.mxu0 0.0
      %612 = vmatmul.mubr.f32.gmra.mxu0 %v540
      %v613 = vpop.f32.mrf.mxu0
      %v614 = vadd.f32 %v534, %v613
      %v615 = vpop.f32.mrf.mxu0
      %616 = vdwg.mxu0
      %v617 = vmax.f32 %v609, 0.0
      %v618 = vmax.f32 %v614, 0.0
      %v619 = vld [vmem:[%s7] sm:$0xff]
      %v620 = vld [vmem:[%s7 + $0x8] sm:$0xff]
      %v621 = vld [vmem:[%s7 + $0x10] sm:$0xff]
      %v622 = vld [vmem:[%s7 + $0x18] sm:$0xff]
      %v623 = vld [vmem:[%s8] sm:$0x1]
      %v625 = vlaneseq
      %v626 = vshrl.u32 %v625, 7
      %v627 = vsub.s32 0, %v626
      %v628 = vrot.slane %v623, %v627
      %v631 = vsel %vm441, %v617, 0
      %v634 = vsel %vm441, %v618, 0
      %636 = vmatprep.subr.mxu0 0.0
      %637 = vmatpush1.msra.mxu0 0.0
      %638 = vmatprep.subr.mxu0 0.0
      %639 = vmatpush1.msra.mxu0 0.0
      %640 = vmatprep.subr.mxu0 0.0
      %641 = vmatpush1.msra.mxu0 0.0
      %642 = vmatprep.subr.mxu0 0.0
      %643 = vmatpush1.msra.mxu0 0.0
      %644 = vmatprep.subr.mxu0 0.0
      %645 = vmatpush1.msra.mxu0 0.0
      %646 = vmatprep.subr.mxu0 0.0
      %647 = vmatpush1.msra.mxu0 0.0
      %648 = vmatprep.subr.mxu0 0.0
      %649 = vmatpush1.msra.mxu0 0.0
      %650 = vmatprep.subr.mxu0 0.0
      %651 = vmatpush1.msra.mxu0 0.0
      %652 = vmatprep.subr.mxu0 0.0
      %653 = vmatpush1.msra.mxu0 0.0
      %654 = vmatprep.subr.mxu0 0.0
      %655 = vmatpush1.msra.mxu0 0.0
      %656 = vmatprep.subr.mxu0 0.0
      %657 = vmatpush1.msra.mxu0 0.0
      %658 = vmatprep.subr.mxu0 0.0
      %659 = vmatpush1.msra.mxu0 0.0
      %660 = vmatprep.subr.mxu0 0.0
      %661 = vmatpush1.msra.mxu0 %v622
      %662 = vmatprep.subr.mxu0 0.0
      %663 = vmatpush1.msra.mxu0 %v621
      %664 = vmatprep.subr.mxu0 0.0
      %665 = vmatpush1.msra.mxu0 %v620
      %666 = vmatprep.subr.mxu0 0.0
      %667 = vmatpush1.msra.mxu0 %v619
      %668 = vmatprep.subr.mxu0 0.0
      %669 = vmatpush2.msra.mxu0 0.0
      %670 = vmatprep.subr.mxu0 0.0
      %671 = vmatpush2.msra.mxu0 0.0
      %672 = vmatprep.subr.mxu0 0.0
      %673 = vmatpush2.msra.mxu0 0.0
      %674 = vmatprep.subr.mxu0 0.0
      %675 = vmatpush2.msra.mxu0 0.0
      %676 = vmatprep.subr.mxu0 0.0
      %677 = vmatpush2.msra.mxu0 0.0
      %678 = vmatprep.subr.mxu0 0.0
      %679 = vmatpush2.msra.mxu0 0.0
      %680 = vmatprep.subr.mxu0 0.0
      %681 = vmatpush2.msra.mxu0 0.0
      %682 = vmatprep.subr.mxu0 0.0
      %683 = vmatpush2.msra.mxu0 0.0
      %684 = vmatprep.subr.mxu0 0.0
      %685 = vmatpush2.msra.mxu0 0.0
      %686 = vmatprep.subr.mxu0 0.0
      %687 = vmatpush2.msra.mxu0 0.0
      %688 = vmatprep.subr.mxu0 0.0
      %689 = vmatpush2.msra.mxu0 0.0
      %690 = vmatprep.subr.mxu0 0.0
      %691 = vmatpush2.msra.mxu0 0.0
      %692 = vmatprep.subr.mxu0 0.0
      %693 = vmatpush2.msra.mxu0 0.0
      %694 = vmatprep.subr.mxu0 0.0
      %695 = vmatpush2.msra.mxu0 0.0
      %696 = vmatprep.subr.mxu0 0.0
      %697 = vmatpush2.msra.mxu0 0.0
      %698 = vmatprep.subr.mxu0 0.0
      %699 = vmatpush2.msra.mxu0 0.0
      %700 = vmatprep.mubr.f32.mxu0 0.0
      %701 = vmatmul.mubr.f32.gmra.mxu0 %v631
      %v702 = vpop.f32.mrf.mxu0
      %v703 = vadd.f32 %v628, %v702
      %v704 = vpop.f32.mrf.mxu0
      %705 = vmatprep.mubr.f32.mxu0 0.0
      %706 = vmatmul.mubr.f32.gmra.mxu0 %v634
      %v707 = vpop.f32.mrf.mxu0
      %v708 = vadd.f32 %v628, %v707
      %v709 = vpop.f32.mrf.mxu0
      %710 = vdwg.mxu0
      %711 = vst [vmem:[%s334] sm:$0xff] %v703
      %712 = vst [vmem:[%s334 + $0x8] sm:$0xff] %v708
      %s713 = smul.u32 2, %s20
      %p714 = scmp.lt.s32.totalorder %s713, 5
      %s715 = scalar_select %p714, %s713, 5
      %s716 = smul.addr %s715, 8
      %s717 = scalar_lea.vmem %s9, %s716
      // Predicated region
      $region57: #{trunknet_forward.1} parent=55 // pred_check
        %p718 = pneg %p232
      $region58: #{trunknet_forward.1} parent=55 // pred_check_branch
        %720 = sbr.rel (%p718) target = $region60
      $region59: #{trunknet_forward.1} parent=55 // pred_region
        %s721 = smul.u32 2, %s20
      $region60: #{trunknet_forward.1} parent=55 // pred_fallthru
        _
    $region56: #{trunknet_forward.1} parent=5 // pred_fallthru
      _
    %p722 = scmp.le.s32.totalorder 2, %s15
    // Predicated region
    $region61: #{trunknet_forward.1} parent=5 // pred_check
      %p723 = pneg %p722
    $region62: #{trunknet_forward.1} parent=5 // pred_check_branch
      %725 = sbr.rel (%p723) target = $region64
    $region63: #{trunknet_forward.1} parent=5 // pred_region
      %s726 = ssub.s32 %s15, 2
      // Predicated region
      $region65: #{trunknet_forward.1} parent=63 // pred_check
        %p727 = pneg %p238
      $region66: #{trunknet_forward.1} parent=63 // pred_check_branch
        %729 = sbr.rel (%p727) target = $region68
      $region67: #{trunknet_forward.1} parent=63 // pred_region
        %s730 = smul.u32 2, %s21
        %p731 = scmp.lt.s32.totalorder %s730, 5
        %s732 = scalar_select %p731, %s730, 5
        %s733 = smul.addr %s732, 8
        %s734 = scalar_lea.vmem %s9, %s733
      $region68: #{trunknet_forward.1} parent=63 // pred_fallthru
        _
    $region64: #{trunknet_forward.1} parent=5 // pred_fallthru
      _
  $region6: #{trunknet_forward.1} parent=0 // loop_footer
    %s19 = sadd.s32 1, %s15
  $region7: #{trunknet_forward.1} parent=0 // loop_footer_branch
    %14 = sbr.rel target = $region3
  $region8: #{trunknet_forward.1} parent=0 // loop_exit
    _

</llo_original>
